<compile_context>
chip_gen: v7x
topology: tpu7x:2x2x1
jax: 0.10.0
libtpu: 0.0.40
codegen_flags: <defaults>
</compile_context>

<pallas_src>
import jax
import jax.numpy as jnp
from jax.experimental import pallas as pl
from jax.experimental.pallas import tpu as pltpu


# --------------------------------------------------------------------------
# Kernel
# --------------------------------------------------------------------------
def _attention_kernel(f_ref, h_ref, wf_ref, bf_ref, wh_ref, bh_ref,
                      we_ref, be_ref, ctx_ref, attn_ref):
    # f_ref:    (tb, L, E)   features tile
    # h_ref:    (tb, H)      hidden-state tile (2D, sublane/lane dense)
    # wf_ref:   (E, A)  pre-transposed Lf weight,  bf_ref: (1, A) f32
    # wh_ref:   (H, A)  pre-transposed Lh weight,  bh_ref: (1, A) f32
    # we_ref:   (1, A)  Le weight row (f32),       be_ref: (1,) f32 scalar in SMEM
    # ctx_ref:  (tb, E),  attn_ref: (tb, L)        (2D, lane-dense outputs)
    tb, L, E = f_ref.shape
    A = wf_ref.shape[1]

    f = f_ref[...]                                           # (tb, L, E)

    # Lf(features): one (tb*L, E) @ (E, A) MXU matmul, f32 accumulation.
    lf = jnp.dot(f.reshape(tb * L, E), wf_ref[...],
                 preferred_element_type=jnp.float32) + bf_ref[...]
    # Lh(h): (tb, H) @ (H, A)
    lh = jnp.dot(h_ref[...], wh_ref[...],
                 preferred_element_type=jnp.float32) + bh_ref[...]

    # tanh(Lf(features) + Lh(h).unsqueeze(1))      -> (tb, L, A), f32
    t = jnp.tanh(lf.reshape(tb, L, A) + lh[:, None, :])

    # Le: contract A on the lane axis -> scores (tb, L); L stays lane-major.
    e = jnp.sum(t * we_ref[...], axis=-1) + be_ref[0]        # (tb, L)

    # Softmax over the sequence axis (lane reductions); reciprocal on the EUP.
    m = jnp.max(e, axis=-1, keepdims=True)
    p = jnp.exp(e - m)
    s = jnp.sum(p, axis=-1, keepdims=True)
    attn = p * pl.reciprocal(s, approx=False)                # (tb, L)
    attn_ref[...] = attn.astype(attn_ref.dtype)

    # context = attention-weighted sum of features.
    f32 = f.astype(jnp.float32)
    if L <= 256:
        # Small L: VPU multiply + sublane reduce. The batched MXU form would
        # issue tb separate M=1 matmuls (push/drain latency per batch row) in
        # an HBM-bound kernel where the VPU/XLU have slack.
        ctx = jnp.sum(attn[:, :, None] * f32, axis=1)        # (tb, E)
    else:
        # Large L: batched MXU matvec.
        ctx = jnp.einsum("bql,ble->bqe", attn[:, None, :], f32,
                         preferred_element_type=jnp.float32)[:, 0, :]
    ctx_ref[...] = ctx.astype(ctx_ref.dtype)


# --------------------------------------------------------------------------
# Generation-aware tiling
# --------------------------------------------------------------------------
def _hw_config():
    """Returns (features-tile budget bytes, vmem_limit_bytes, split_for_2_TCs)."""
    vmem = None
    try:
        info = pltpu.get_tpu_info()
        vmem = getattr(info, "vmem_capacity_bytes", None)
    except Exception:
        vmem = None
    if vmem is not None and vmem > (96 << 20):
        # v5e / v6e: 128 MiB VMEM, single TensorCore -> big tiles, no split.
        return 24 << 20, 96 << 20, False
    # v7x (64 MiB per TC, 2 TCs) or unknown generation: stay conservative.
    return 6 << 20, 48 << 20, vmem is not None


def _choose_tb(B, L, E, itemsize, budget, split_two):
    """Batch-tile size: a divisor of B (no padding copy), sublane-aligned."""
    per_elem = max(1, L * E * itemsize)          # features bytes / batch element
    max_tb = max(1, budget // per_elem)
    divisors = [d for d in range(1, B + 1) if B % d == 0]
    # Dense 2D h/ctx/attn blocks need the batch-tile (sublane) dim to be a
    # multiple of 8 or the full batch.
    ok = [d for d in divisors if (d == B or d % 8 == 0) and d <= max_tb]
    if not ok:
        # No aligned divisor fits the soft budget: fall back to the full batch
        # (full-dim blocks are always legal).
        return B
    tb = max(ok)
    if split_two and tb == B and B > 1:
        # v7x: keep >= 2 grid steps so both TensorCores get work.
        halves = [d for d in divisors if d < B and d % 8 == 0]
        if halves:
            tb = max(halves)
    return tb


# --------------------------------------------------------------------------
# Wrapper
# --------------------------------------------------------------------------
def attention_forward(features, h, params):
    """features: (B, L, E), h: (B, H) -> (context (B, E), attn (B, L))."""
    B, L, E = features.shape
    H = h.shape[1]
    A = params["wf"].shape[0]
    dtype = features.dtype
    itemsize = jnp.dtype(dtype).itemsize

    budget, vmem_limit, split_two = _hw_config()
    tb = _choose_tb(B, L, E, itemsize, budget, split_two)
    n_tiles = B // tb
    # TODO(synk): add an L grid axis (two-pass or online softmax) when a single
    # (1, L, E) slab no longer fits the per-generation VMEM tile budget.

    wf_t = params["wf"].T.astype(dtype)              # (E, A) pre-transposed
    wh_t = params["wh"].T.astype(dtype)              # (H, A) pre-transposed
    bf = params["bf"].reshape(1, A).astype(jnp.float32)
    bh = params["bh"].reshape(1, A).astype(jnp.float32)
    we = params["we"].reshape(1, A).astype(jnp.float32)
    be = params["be"].reshape(1).astype(jnp.float32)  # scalar -> SMEM

    flops = (2 * B * L * E * A      # Lf
             + 2 * B * H * A        # Lh
             + 2 * B * L * A        # Le + adds
             + 2 * B * L * E)       # context
    transcendentals = B * L * A + B * L              # tanh + exp
    bytes_accessed = ((features.size + h.size + B * E + B * L) * itemsize
                      + (wf_t.size + wh_t.size) * itemsize
                      + (bf.size + bh.size + we.size + be.size) * 4)

    ctx, attn = pl.pallas_call(
        _attention_kernel,
        out_shape=(
            jax.ShapeDtypeStruct((B, E), dtype),
            jax.ShapeDtypeStruct((B, L), dtype),
        ),
        grid=(n_tiles,),
        in_specs=[
            pl.BlockSpec((tb, L, E), lambda i: (i, 0, 0)),   # features tile
            pl.BlockSpec((tb, H), lambda i: (i, 0)),         # h tile (dense 2D)
            # Grid-invariant operands (constant index_map -> fetched once).
            pl.BlockSpec((E, A), lambda i: (0, 0)),          # Wf^T
            pl.BlockSpec((1, A), lambda i: (0, 0)),          # bf
            pl.BlockSpec((H, A), lambda i: (0, 0)),          # Wh^T
            pl.BlockSpec((1, A), lambda i: (0, 0)),          # bh
            pl.BlockSpec((1, A), lambda i: (0, 0)),          # We row
            pl.BlockSpec(memory_space=pltpu.MemorySpace.SMEM),  # be scalar
        ],
        out_specs=(
            pl.BlockSpec((tb, E), lambda i: (i, 0)),         # context (dense)
            pl.BlockSpec((tb, L), lambda i: (i, 0)),         # attn (dense)
        ),
        compiler_params=pltpu.CompilerParams(
            dimension_semantics=("parallel",),
            vmem_limit_bytes=vmem_limit,
        ),
        cost_estimate=pl.CostEstimate(
            flops=flops,
            transcendentals=transcendentals,
            bytes_accessed=bytes_accessed,
        ),
    )(features, h, wf_t, bf, wh_t, bh, we, be)
    return ctx, attn


# --------------------------------------------------------------------------
# Pure-JAX reference and deterministic param init
# --------------------------------------------------------------------------
def attention_reference(features, h, p):
    """Matches the PyTorch forward exactly."""
    lf = features @ p["wf"].T + p["bf"]                       # (B, L, A)
    lh = h @ p["wh"].T + p["bh"]                              # (B, A)
    e = jnp.tanh(lf + lh[:, None, :]) @ p["we"].T + p["be"]   # (B, L, 1)
    e = e[..., 0]                                             # (B, L)
    attn = jax.nn.softmax(e, axis=1)
    context = (attn[..., None] * features).sum(axis=1)        # (B, E)
    return context, attn


def init_params(key, hidden_dim, embedding_dim, attn_dim):
    """PyTorch-style uniform Linear init."""
    ks = jax.random.split(key, 6)

    def lin(kw, kb, out_dim, in_dim):
        bound = 1.0 / jnp.sqrt(in_dim)
        w = jax.random.uniform(kw, (out_dim, in_dim), jnp.float32, -bound, bound)
        b = jax.random.uniform(kb, (out_dim,), jnp.float32, -bound, bound)
        return w, b

    wh, bh = lin(ks[0], ks[1], attn_dim, hidden_dim)      # Lh
    wf, bf = lin(ks[2], ks[3], attn_dim, embedding_dim)   # Lf
    we, be = lin(ks[4], ks[5], 1, attn_dim)               # Le
    return {"wh": wh, "bh": bh, "wf": wf, "bf": bf, "we": we, "be": be}


if __name__ == "__main__":
    B, L = 2, 8                 # batch, number of feature locations (seq)
    embedding_dim = 32
    hidden_dim = 32
    attn_dim = 32

    key = jax.random.PRNGKey(0)
    k_feat, k_h, k_params = jax.random.split(key, 3)

    features = jax.random.normal(k_feat, (B, L, embedding_dim), jnp.float32)
    h = jax.random.normal(k_h, (B, hidden_dim), jnp.float32)
    params = init_params(k_params, hidden_dim, embedding_dim, attn_dim)

    context, attn = attention_forward(features, h, params)
    jax.block_until_ready((context, attn))

    ctx_ref, attn_ref = attention_reference(features, h, params)
    assert context.shape == (B, embedding_dim) and attn.shape == (B, L)
    assert jnp.allclose(context, ctx_ref, atol=1e-5, rtol=1e-5)
    assert jnp.allclose(attn, attn_ref, atol=1e-5, rtol=1e-5)

    print("KERNEL_OK")
</pallas_src>

<mosaic_0001>
module attributes {stable_mosaic.version = 11 : i64} {
  func.func @_attention_kernel(%arg0: i32, %arg1: memref<2x8x32xf32, #tpu.memory_space<vmem>>, %arg2: memref<2x32xf32, #tpu.memory_space<vmem>>, %arg3: memref<32x32xf32, #tpu.memory_space<vmem>>, %arg4: memref<1x32xf32, #tpu.memory_space<vmem>>, %arg5: memref<32x32xf32, #tpu.memory_space<vmem>>, %arg6: memref<1x32xf32, #tpu.memory_space<vmem>>, %arg7: memref<1x32xf32, #tpu.memory_space<vmem>>, %arg8: memref<1xf32, #tpu.memory_space<smem>>, %arg9: memref<2x32xf32, #tpu.memory_space<vmem>>, %arg10: memref<2x8xf32, #tpu.memory_space<vmem>>) attributes {dimension_semantics = [#tpu.dimension_semantics<parallel>], iteration_bounds = array<i64: 1>, scalar_prefetch = 0 : i64, scratch_operands = 0 : i64, tpu.core_type = #tpu.core_type<tc>, window_params = [{transform_indices = @transform_0, window_bounds = array<i64: 2, 8, 32>}, {transform_indices = @transform_1, window_bounds = array<i64: 2, 32>}, {pipeline_mode = #tpu.pipeline_mode<synchronous>, transform_indices = @transform_2, window_bounds = array<i64: 32, 32>}, {pipeline_mode = #tpu.pipeline_mode<synchronous>, transform_indices = @transform_3, window_bounds = array<i64: 1, 32>}, {pipeline_mode = #tpu.pipeline_mode<synchronous>, transform_indices = @transform_4, window_bounds = array<i64: 32, 32>}, {pipeline_mode = #tpu.pipeline_mode<synchronous>, transform_indices = @transform_5, window_bounds = array<i64: 1, 32>}, {pipeline_mode = #tpu.pipeline_mode<synchronous>, transform_indices = @transform_6, window_bounds = array<i64: 1, 32>}, {transform_indices = @transform_7, window_bounds = array<i64: 1>}, {transform_indices = @transform_8, window_bounds = array<i64: 2, 32>}, {transform_indices = @transform_9, window_bounds = array<i64: 2, 8>}]} {
    %c0 = arith.constant 0 : index
    %c0_0 = arith.constant 0 : index
    %c0_1 = arith.constant 0 : index
    %0 = vector.load %arg1[%c0, %c0_0, %c0_1] : memref<2x8x32xf32, #tpu.memory_space<vmem>>, vector<2x8x32xf32>
    %1 = vector.shape_cast %0 : vector<2x8x32xf32> to vector<16x32xf32>
    %c0_2 = arith.constant 0 : index
    %c0_3 = arith.constant 0 : index
    %2 = vector.load %arg3[%c0_2, %c0_3] : memref<32x32xf32, #tpu.memory_space<vmem>>, vector<32x32xf32>
    %cst = arith.constant dense<0.000000e+00> : vector<16x32xf32>
    %3 = tpu.matmul %1, %2, %cst {dimension_numbers = #tpu.dot_dimension_numbers<[1], [0], [0], [1], [0, 0, 1, 1], [], []>} : vector<16x32xf32>, vector<32x32xf32>, vector<16x32xf32> -> vector<16x32xf32>
    %c0_4 = arith.constant 0 : index
    %c0_5 = arith.constant 0 : index
    %4 = vector.load %arg4[%c0_4, %c0_5] : memref<1x32xf32, #tpu.memory_space<vmem>>, vector<1x32xf32>
    %5 = vector.broadcast %4 : vector<1x32xf32> to vector<16x32xf32>
    %6 = arith.addf %3, %5 : vector<16x32xf32>
    %c0_6 = arith.constant 0 : index
    %c0_7 = arith.constant 0 : index
    %7 = vector.load %arg2[%c0_6, %c0_7] : memref<2x32xf32, #tpu.memory_space<vmem>>, vector<2x32xf32>
    %c0_8 = arith.constant 0 : index
    %c0_9 = arith.constant 0 : index
    %8 = vector.load %arg5[%c0_8, %c0_9] : memref<32x32xf32, #tpu.memory_space<vmem>>, vector<32x32xf32>
    %cst_10 = arith.constant dense<0.000000e+00> : vector<2x32xf32>
    %9 = tpu.matmul %7, %8, %cst_10 {dimension_numbers = #tpu.dot_dimension_numbers<[1], [0], [0], [1], [0, 0, 1, 1], [], []>} : vector<2x32xf32>, vector<32x32xf32>, vector<2x32xf32> -> vector<2x32xf32>
    %c0_11 = arith.constant 0 : index
    %c0_12 = arith.constant 0 : index
    %10 = vector.load %arg6[%c0_11, %c0_12] : memref<1x32xf32, #tpu.memory_space<vmem>>, vector<1x32xf32>
    %11 = vector.broadcast %10 : vector<1x32xf32> to vector<2x32xf32>
    %12 = arith.addf %9, %11 : vector<2x32xf32>
    %13 = vector.shape_cast %6 : vector<16x32xf32> to vector<2x8x32xf32>
    %14 = vector.shape_cast %12 : vector<2x32xf32> to vector<2x1x32xf32>
    %15 = vector.broadcast %14 : vector<2x1x32xf32> to vector<2x8x32xf32>
    %16 = arith.addf %13, %15 : vector<2x8x32xf32>
    %17 = math.tanh %16 : vector<2x8x32xf32>
    %c0_13 = arith.constant 0 : index
    %c0_14 = arith.constant 0 : index
    %18 = vector.load %arg7[%c0_13, %c0_14] : memref<1x32xf32, #tpu.memory_space<vmem>>, vector<1x32xf32>
    %19 = vector.shape_cast %18 : vector<1x32xf32> to vector<1x1x32xf32>
    %20 = vector.broadcast %19 : vector<1x1x32xf32> to vector<2x8x32xf32>
    %21 = arith.mulf %17, %20 : vector<2x8x32xf32>
    %cst_15 = arith.constant dense<0.000000e+00> : vector<2x8xf32>
    %22 = vector.multi_reduction <add>, %21, %cst_15 [2] : vector<2x8x32xf32> to vector<2x8xf32>
    %c0_16 = arith.constant 0 : index
    %23 = memref.load %arg8[%c0_16] : memref<1xf32, #tpu.memory_space<smem>>
    %24 = vector.broadcast %23 : f32 to vector<2x8xf32>
    %25 = arith.addf %22, %24 : vector<2x8xf32>
    %cst_17 = arith.constant dense<0xFF800000> : vector<2xf32>
    %26 = vector.multi_reduction <maximumf>, %25, %cst_17 [1] : vector<2x8xf32> to vector<2xf32>
    %27 = vector.shape_cast %26 : vector<2xf32> to vector<2x1xf32>
    %28 = vector.broadcast %27 : vector<2x1xf32> to vector<2x8xf32>
    %29 = arith.subf %25, %28 : vector<2x8xf32>
    %30 = math.exp %29 : vector<2x8xf32>
    %cst_18 = arith.constant dense<0.000000e+00> : vector<2xf32>
    %31 = vector.multi_reduction <add>, %30, %cst_18 [1] : vector<2x8xf32> to vector<2xf32>
    %32 = vector.shape_cast %31 : vector<2xf32> to vector<2x1xf32>
    %33 = tpu.reciprocal %32 : vector<2x1xf32> -> vector<2x1xf32>
    %34 = vector.broadcast %33 : vector<2x1xf32> to vector<2x8xf32>
    %35 = arith.mulf %30, %34 : vector<2x8xf32>
    %c0_19 = arith.constant 0 : index
    %c0_20 = arith.constant 0 : index
    %36 = vector.load %arg10[%c0_19, %c0_20] : memref<2x8xf32, #tpu.memory_space<vmem>>, vector<2x8xf32>
    tpu.vector_store %arg10[%c0_19, %c0_20], %35 {strides = array<i32>} : memref<2x8xf32, #tpu.memory_space<vmem>>, vector<2x8xf32>,
    %37 = vector.shape_cast %35 : vector<2x8xf32> to vector<2x8x1xf32>
    %38 = vector.broadcast %37 : vector<2x8x1xf32> to vector<2x8x32xf32>
    %39 = arith.mulf %38, %0 : vector<2x8x32xf32>
    %cst_21 = arith.constant dense<0.000000e+00> : vector<2x32xf32>
    %40 = vector.multi_reduction <add>, %39, %cst_21 [1] : vector<2x8x32xf32> to vector<2x32xf32>
    %c0_22 = arith.constant 0 : index
    %c0_23 = arith.constant 0 : index
    %41 = vector.load %arg9[%c0_22, %c0_23] : memref<2x32xf32, #tpu.memory_space<vmem>>, vector<2x32xf32>
    tpu.vector_store %arg9[%c0_22, %c0_23], %40 {strides = array<i32>} : memref<2x32xf32, #tpu.memory_space<vmem>>, vector<2x32xf32>,
    return
  }
  func.func @transform_0(%arg0: i32) -> (i32, i32, i32) {
    %c0_i32 = arith.constant 0 : i32
    %c0_i32_0 = arith.constant 0 : i32
    %c0_i32_1 = arith.constant 0 : i32
    return %arg0, %c0_i32, %c0_i32_0 : i32, i32, i32
  }
  func.func @transform_1(%arg0: i32) -> (i32, i32) {
    %c0_i32 = arith.constant 0 : i32
    %c0_i32_0 = arith.constant 0 : i32
    return %arg0, %c0_i32 : i32, i32
  }
  func.func @transform_2(%arg0: i32) -> (i32, i32) {
    %c0_i32 = arith.constant 0 : i32
    %c0_i32_0 = arith.constant 0 : i32
    %c0_i32_1 = arith.constant 0 : i32
    return %c0_i32, %c0_i32_0 : i32, i32
  }
  func.func @transform_3(%arg0: i32) -> (i32, i32) {
    %c0_i32 = arith.constant 0 : i32
    %c0_i32_0 = arith.constant 0 : i32
    %c0_i32_1 = arith.constant 0 : i32
    return %c0_i32, %c0_i32_0 : i32, i32
  }
  func.func @transform_4(%arg0: i32) -> (i32, i32) {
    %c0_i32 = arith.constant 0 : i32
    %c0_i32_0 = arith.constant 0 : i32
    %c0_i32_1 = arith.constant 0 : i32
    return %c0_i32, %c0_i32_0 : i32, i32
  }
  func.func @transform_5(%arg0: i32) -> (i32, i32) {
    %c0_i32 = arith.constant 0 : i32
    %c0_i32_0 = arith.constant 0 : i32
    %c0_i32_1 = arith.constant 0 : i32
    return %c0_i32, %c0_i32_0 : i32, i32
  }
  func.func @transform_6(%arg0: i32) -> (i32, i32) {
    %c0_i32 = arith.constant 0 : i32
    %c0_i32_0 = arith.constant 0 : i32
    %c0_i32_1 = arith.constant 0 : i32
    return %c0_i32, %c0_i32_0 : i32, i32
  }
  func.func @transform_7(%arg0: i32) -> i32 {
    %c0_i32 = arith.constant 0 : i32
    %c0_i32_0 = arith.constant 0 : i32
    return %c0_i32 : i32
  }
  func.func @transform_8(%arg0: i32) -> (i32, i32) {
    %c0_i32 = arith.constant 0 : i32
    %c0_i32_0 = arith.constant 0 : i32
    return %arg0, %c0_i32 : i32, i32
  }
  func.func @transform_9(%arg0: i32) -> (i32, i32) {
    %c0_i32 = arith.constant 0 : i32
    %c0_i32_0 = arith.constant 0 : i32
    return %arg0, %c0_i32 : i32, i32
  }
}

</mosaic_0001>

<llo_original>
// kernel: tpu_custom_call.1
$region0: #{tpu_custom_call.1}
  #allocation0 [shape = 'u32[]', space=smem, size = 0x4, offset = 0x4, fixed_abs, tag = 'smem constant byte address 0x4 - core index']
  #allocation1 [shape = 'u32[144,128]{1,0:T(1,128)}', space=vmem, size = 0x12000, scoped, tag = 'internal scratch']
  #allocation2 [shape = 'f32[1]{0:T(128)S(6)}', space=smem, size = 0x200, scoped, tag = 'scoped memory for tpu_custom_call.1']
  %s0 = inlined_call_operand.hbm [shape: f32[2,8,32], index: 0, kind: input, shape index: {}]
  %s1 = inlined_call_operand.vmem [shape: f32[2,32], index: 1, kind: input, shape index: {}]
  %s2 = inlined_call_operand.hbm [shape: f32[32,32], index: 2, kind: input, shape index: {}]
  %s3 = inlined_call_operand.vmem [shape: f32[1,32], index: 3, kind: input, shape index: {}]
  %s4 = inlined_call_operand.hbm [shape: f32[32,32], index: 4, kind: input, shape index: {}]
  %s5 = inlined_call_operand.vmem [shape: f32[1,32], index: 5, kind: input, shape index: {}]
  %s6 = inlined_call_operand.vmem [shape: f32[1,32], index: 6, kind: input, shape index: {}]
  %s7 = inlined_call_operand.<no memory space> [shape: f32[1], index: 7, kind: input, shape index: {}]
  %s8 = inlined_call_operand.hbm [shape: f32[2,32], index: 8, kind: output, shape index: {0}]
  %s9 = inlined_call_operand.hbm [shape: f32[2,8], index: 9, kind: output, shape index: {1}]
  %10 = xla_tuple %s8, %s9
  %s11 = sld [smem:[#allocation0]]
  $region62: #{tpu_custom_call.1} parent=0
    _
  %s13 = ssub.s32 1, %s11
  %s14 = scalar_select 0, %s13, %s11
  %15 = sst [smem:[#allocation2]] %s7
  $region1: #{tpu_custom_call.1} parent=0
    #allocation3 [shape = 'u8[8192]{0}', space=vmem, size = 0x2000, scoped, tag = 'input window, operand 0, single buffered']
    #allocation4 [shape = 's32[1]{0}', space=sflag, size = 0x4, scoped, tag = 'scoped memory for tpu_custom_call.1']
    #allocation5 [shape = 's32[1]{0}', space=sflag, size = 0x4, scoped, tag = 'scoped memory for tpu_custom_call.1']
    #allocation6 [shape = 'u8[16384]{0}', space=vmem, size = 0x4000, scoped, tag = 'input window, operand 2, single buffered']
    #allocation7 [shape = 's32[1]{0}', space=sflag, size = 0x4, scoped, tag = 'scoped memory for tpu_custom_call.1']
    #allocation8 [shape = 'u8[16384]{0}', space=vmem, size = 0x4000, scoped, tag = 'input window, operand 4, single buffered']
    #allocation9 [shape = 'u8[1024]{0}', space=vmem, size = 0x400, scoped, tag = 'output window, operand 0, single buffered']
    #allocation10 [shape = 'u8[1024]{0}', space=vmem, size = 0x400, scoped, tag = 'output window, operand 1, single buffered']
    #allocation11 [shape = 's32[1]{0}', space=sflag, size = 0x4, scoped, tag = 'scoped memory for tpu_custom_call.1']
    %16 = vsyncpa [#allocation4], 0
    %17 = vsyncpa [#allocation7], 0
    %18 = vsyncpa [#allocation5], 0
    %19 = vsyncpa [#allocation11], 0
    // Predicated region
    $region2: #{tpu_custom_call.1} parent=1 // pred_check
      _
    $region3: #{tpu_custom_call.1} parent=1 // pred_check_branch
      %21 = sbr.rel (0) target = $region5
    $region4: #{tpu_custom_call.1} parent=1 // pred_region
      %s23 = ssub.s32 256, 256
      %24 = vsyncadd [#allocation4], %s23
      %s25 = sshll.u32 [#allocation3], 4
      %s26 = int_to_ptr.vmem [resolvable:$true] %s25
      %31 = dma.hbm_to_vmem [thread:$0]  %s0, 256, %s26, [#allocation4], 128, 128, 8
    $region5: #{tpu_custom_call.1} parent=1 // pred_fallthru
      _
    // Predicated region
    $region6: #{tpu_custom_call.1} parent=1 // pred_check
      _
    $region7: #{tpu_custom_call.1} parent=1 // pred_check_branch
      %33 = sbr.rel (0) target = $region9
    $region8: #{tpu_custom_call.1} parent=1 // pred_region
      _
    $region9: #{tpu_custom_call.1} parent=1 // pred_fallthru
      _
    // Predicated region
    $region10: #{tpu_custom_call.1} parent=1 // pred_check
      _
    $region11: #{tpu_custom_call.1} parent=1 // pred_check_branch
      %35 = sbr.rel (0) target = $region13
    $region12: #{tpu_custom_call.1} parent=1 // pred_region
      %s37 = ssub.s32 512, 512
      %38 = vsyncadd [#allocation7], %s37
      %s39 = sshll.u32 [#allocation6], 4
      %s40 = int_to_ptr.vmem [resolvable:$true] %s39
      %45 = dma.hbm_to_vmem [thread:$0]  %s2, 512, %s40, [#allocation7], 128, 128, 8
    $region13: #{tpu_custom_call.1} parent=1 // pred_fallthru
      _
    // Predicated region
    $region14: #{tpu_custom_call.1} parent=1 // pred_check
      _
    $region15: #{tpu_custom_call.1} parent=1 // pred_check_branch
      %47 = sbr.rel (0) target = $region17
    $region16: #{tpu_custom_call.1} parent=1 // pred_region
      _
    $region17: #{tpu_custom_call.1} parent=1 // pred_fallthru
      _
    // Predicated region
    $region18: #{tpu_custom_call.1} parent=1 // pred_check
      _
    $region19: #{tpu_custom_call.1} parent=1 // pred_check_branch
      %49 = sbr.rel (0) target = $region21
    $region20: #{tpu_custom_call.1} parent=1 // pred_region
      %s51 = ssub.s32 512, 512
      %52 = vsyncadd [#allocation7], %s51
      %s53 = sshll.u32 [#allocation8], 4
      %s54 = int_to_ptr.vmem [resolvable:$true] %s53
      %59 = dma.hbm_to_vmem [thread:$0]  %s4, 512, %s54, [#allocation7], 128, 128, 8
    $region21: #{tpu_custom_call.1} parent=1 // pred_fallthru
      _
    // Predicated region
    $region22: #{tpu_custom_call.1} parent=1 // pred_check
      _
    $region23: #{tpu_custom_call.1} parent=1 // pred_check_branch
      %61 = sbr.rel (0) target = $region25
    $region24: #{tpu_custom_call.1} parent=1 // pred_region
      _
    $region25: #{tpu_custom_call.1} parent=1 // pred_fallthru
      _
    // Predicated region
    $region26: #{tpu_custom_call.1} parent=1 // pred_check
      _
    $region27: #{tpu_custom_call.1} parent=1 // pred_check_branch
      %63 = sbr.rel (0) target = $region29
    $region28: #{tpu_custom_call.1} parent=1 // pred_region
      _
    $region29: #{tpu_custom_call.1} parent=1 // pred_fallthru
      _
    // Predicated region
    $region30: #{tpu_custom_call.1} parent=1 // pred_check
      _
    $region31: #{tpu_custom_call.1} parent=1 // pred_check_branch
      %65 = sbr.rel (0) target = $region33
    $region32: #{tpu_custom_call.1} parent=1 // pred_region
      _
    $region33: #{tpu_custom_call.1} parent=1 // pred_fallthru
      _
    // Predicated region
    $region34: #{tpu_custom_call.1} parent=1 // pred_check
      _
    $region35: #{tpu_custom_call.1} parent=1 // pred_check_branch
      %67 = sbr.rel (0) target = $region37
    $region36: #{tpu_custom_call.1} parent=1 // pred_region
      %68 = dma.done [#allocation4], 256
    $region37: #{tpu_custom_call.1} parent=1 // pred_fallthru
      _
    // Predicated region
    $region38: #{tpu_custom_call.1} parent=1 // pred_check
      _
    $region39: #{tpu_custom_call.1} parent=1 // pred_check_branch
      %70 = sbr.rel (0) target = $region41
    $region40: #{tpu_custom_call.1} parent=1 // pred_region
      %71 = dma.done [#allocation7], 512
    $region41: #{tpu_custom_call.1} parent=1 // pred_fallthru
      _
    // Predicated region
    $region42: #{tpu_custom_call.1} parent=1 // pred_check
      _
    $region43: #{tpu_custom_call.1} parent=1 // pred_check_branch
      %73 = sbr.rel (0) target = $region45
    $region44: #{tpu_custom_call.1} parent=1 // pred_region
      %74 = dma.done [#allocation7], 512
    $region45: #{tpu_custom_call.1} parent=1 // pred_fallthru
      _
    %v75 = vld [vmem:[#allocation3] sm:$0xff]
    %v76 = vld [vmem:[#allocation3 + $0x8] sm:$0xff]
    %v77 = vld [vmem:[#allocation6] sm:$0xff]
    %v78 = vld [vmem:[#allocation6 + $0x8] sm:$0xff]
    %v79 = vld [vmem:[#allocation6 + $0x10] sm:$0xff]
    %v80 = vld [vmem:[#allocation6 + $0x18] sm:$0xff]
    %v81 = vld [vmem:[%s3] sm:$0x1]
    %v83 = vlaneseq
    %v84 = vshrl.u32 %v83, 7
    %v85 = vsub.s32 0, %v84
    %v86 = vrot.slane %v81, %v85
    %vm88 = vcmask 261120
    %v90 = vsel %vm88, %v75, 0
    %v93 = vsel %vm88, %v76, 0
    %95 = vmatprep.subr.mxu0 0.0
    %96 = vmatpush1.msra.mxu0 %v77
    %97 = vmatprep.subr.mxu0 0.0
    %98 = vmatpush1.msra.mxu0 %v78
    %99 = vmatprep.subr.mxu0 0.0
    %100 = vmatpush1.msra.mxu0 %v79
    %101 = vmatprep.subr.mxu0 0.0
    %102 = vmatpush1.msra.mxu0 %v80
    %103 = vmatprep.subr.mxu0 0.0
    %104 = vmatpush1.msra.mxu0 0.0
    %105 = vmatprep.subr.mxu0 0.0
    %106 = vmatpush1.msra.mxu0 0.0
    %107 = vmatprep.subr.mxu0 0.0
    %108 = vmatpush1.msra.mxu0 0.0
    %109 = vmatprep.subr.mxu0 0.0
    %110 = vmatpush1.msra.mxu0 0.0
    %111 = vmatprep.subr.mxu0 0.0
    %112 = vmatpush1.msra.mxu0 0.0
    %113 = vmatprep.subr.mxu0 0.0
    %114 = vmatpush1.msra.mxu0 0.0
    %115 = vmatprep.subr.mxu0 0.0
    %116 = vmatpush1.msra.mxu0 0.0
    %117 = vmatprep.subr.mxu0 0.0
    %118 = vmatpush1.msra.mxu0 0.0
    %119 = vmatprep.subr.mxu0 0.0
    %120 = vmatpush1.msra.mxu0 0.0
    %121 = vmatprep.subr.mxu0 0.0
    %122 = vmatpush1.msra.mxu0 0.0
    %123 = vmatprep.subr.mxu0 0.0
    %124 = vmatpush1.msra.mxu0 0.0
    %125 = vmatprep.subr.mxu0 0.0
    %126 = vmatpush1.msra.mxu0 0.0
    %127 = vmatprep.subr.mxu0 0.0
    %128 = vmatpush1.msra.mxu0 0.0
    %129 = vmatprep.subr.mxu0 0.0
    %130 = vmatpush1.msra.mxu0 0.0
    %131 = vmatprep.subr.mxu0 0.0
    %132 = vmatpush1.msra.mxu0 0.0
    %133 = vmatprep.subr.mxu0 0.0
    %134 = vmatpush1.msra.mxu0 0.0
    %135 = vmatprep.subr.mxu0 0.0
    %136 = vmatpush1.msra.mxu0 0.0
    %137 = vmatprep.subr.mxu0 0.0
    %138 = vmatpush1.msra.mxu0 0.0
    %139 = vmatprep.subr.mxu0 0.0
    %140 = vmatpush1.msra.mxu0 0.0
    %141 = vmatprep.subr.mxu0 0.0
    %142 = vmatpush1.msra.mxu0 0.0
    %143 = vmatprep.subr.mxu0 0.0
    %144 = vmatpush1.msra.mxu0 0.0
    %145 = vmatprep.subr.mxu0 0.0
    %146 = vmatpush1.msra.mxu0 0.0
    %147 = vmatprep.subr.mxu0 0.0
    %148 = vmatpush1.msra.mxu0 0.0
    %149 = vmatprep.subr.mxu0 0.0
    %150 = vmatpush1.msra.mxu0 0.0
    %151 = vmatprep.subr.mxu0 0.0
    %152 = vmatpush1.msra.mxu0 0.0
    %153 = vmatprep.subr.mxu0 0.0
    %154 = vmatpush1.msra.mxu0 0.0
    %155 = vmatprep.subr.mxu0 0.0
    %156 = vmatpush1.msra.mxu0 0.0
    %157 = vmatprep.subr.mxu0 0.0
    %158 = vmatpush1.msra.mxu0 0.0
    %159 = vmatprep.mubr.f32.mxu0 0.0
    %160 = vmatmul.mubr.f32.gmra.mrb[0].mxu0 %v90
    %v161 = vpop.f32.mrb[0].mxu0
    %v162 = vadd.f32 %v86, %v161
    %v163 = vpop.f32.mrb[0].mxu0
    %164 = vmatprep.mubr.f32.mxu0 0.0
    %165 = vmatmul.mubr.f32.gmra.mrb[0].mxu0 %v93
    %v166 = vpop.f32.mrb[0].mxu0
    %v167 = vadd.f32 %v86, %v166
    %v168 = vpop.f32.mrb[0].mxu0
    %169 = vdwg.mxu0
    %v170 = vld [vmem:[%s1] sm:$0x3]
    %v171 = vld [vmem:[#allocation8] sm:$0xff]
    %v172 = vld [vmem:[#allocation8 + $0x8] sm:$0xff]
    %v173 = vld [vmem:[#allocation8 + $0x10] sm:$0xff]
    %v174 = vld [vmem:[#allocation8 + $0x18] sm:$0xff]
    %v175 = vld [vmem:[%s5] sm:$0x1]
    %v177 = vlaneseq
    %v178 = vshrl.u32 %v177, 7
    %v179 = vsub.s32 0, %v178
    %v180 = vrot.slane %v175, %v179
    %v183 = vsel %vm88, %v170, 0
    %185 = vmatprep.subr.mxu0 0.0
    %186 = vmatpush1.msra.mxu0 %v171
    %187 = vmatprep.subr.mxu0 0.0
    %188 = vmatpush1.msra.mxu0 %v172
    %189 = vmatprep.subr.mxu0 0.0
    %190 = vmatpush1.msra.mxu0 %v173
    %191 = vmatprep.subr.mxu0 0.0
    %192 = vmatpush1.msra.mxu0 %v174
    %193 = vmatprep.subr.mxu0 0.0
    %194 = vmatpush1.msra.mxu0 0.0
    %195 = vmatprep.subr.mxu0 0.0
    %196 = vmatpush1.msra.mxu0 0.0
    %197 = vmatprep.subr.mxu0 0.0
    %198 = vmatpush1.msra.mxu0 0.0
    %199 = vmatprep.subr.mxu0 0.0
    %200 = vmatpush1.msra.mxu0 0.0
    %201 = vmatprep.subr.mxu0 0.0
    %202 = vmatpush1.msra.mxu0 0.0
    %203 = vmatprep.subr.mxu0 0.0
    %204 = vmatpush1.msra.mxu0 0.0
    %205 = vmatprep.subr.mxu0 0.0
    %206 = vmatpush1.msra.mxu0 0.0
    %207 = vmatprep.subr.mxu0 0.0
    %208 = vmatpush1.msra.mxu0 0.0
    %209 = vmatprep.subr.mxu0 0.0
    %210 = vmatpush1.msra.mxu0 0.0
    %211 = vmatprep.subr.mxu0 0.0
    %212 = vmatpush1.msra.mxu0 0.0
    %213 = vmatprep.subr.mxu0 0.0
    %214 = vmatpush1.msra.mxu0 0.0
    %215 = vmatprep.subr.mxu0 0.0
    %216 = vmatpush1.msra.mxu0 0.0
    %217 = vmatprep.subr.mxu0 0.0
    %218 = vmatpush1.msra.mxu0 0.0
    %219 = vmatprep.subr.mxu0 0.0
    %220 = vmatpush1.msra.mxu0 0.0
    %221 = vmatprep.subr.mxu0 0.0
    %222 = vmatpush1.msra.mxu0 0.0
    %223 = vmatprep.subr.mxu0 0.0
    %224 = vmatpush1.msra.mxu0 0.0
    %225 = vmatprep.subr.mxu0 0.0
    %226 = vmatpush1.msra.mxu0 0.0
    %227 = vmatprep.subr.mxu0 0.0
    %228 = vmatpush1.msra.mxu0 0.0
    %229 = vmatprep.subr.mxu0 0.0
    %230 = vmatpush1.msra.mxu0 0.0
    %231 = vmatprep.subr.mxu0 0.0
    %232 = vmatpush1.msra.mxu0 0.0
    %233 = vmatprep.subr.mxu0 0.0
    %234 = vmatpush1.msra.mxu0 0.0
    %235 = vmatprep.subr.mxu0 0.0
    %236 = vmatpush1.msra.mxu0 0.0
    %237 = vmatprep.subr.mxu0 0.0
    %238 = vmatpush1.msra.mxu0 0.0
    %239 = vmatprep.subr.mxu0 0.0
    %240 = vmatpush1.msra.mxu0 0.0
    %241 = vmatprep.subr.mxu0 0.0
    %242 = vmatpush1.msra.mxu0 0.0
    %243 = vmatprep.subr.mxu0 0.0
    %244 = vmatpush1.msra.mxu0 0.0
    %245 = vmatprep.subr.mxu0 0.0
    %246 = vmatpush1.msra.mxu0 0.0
    %247 = vmatprep.subr.mxu0 0.0
    %248 = vmatpush1.msra.mxu0 0.0
    %249 = vmatprep.mubr.f32.mxu0 0.0
    %250 = vmatmul.mubr.f32.gmra.mrb[0].mxu0 %v183
    %v251 = vpop.f32.mrb[0].mxu0
    %v252 = vadd.f32 %v180, %v251
    %v253 = vpop.f32.mrb[0].mxu0
    %254 = vdwg.mxu0
    %v257 = vunpack.c.l.s4 1966171168
    %v258 = vunpack.c.0.s8 %v257
    %v259 = vlaneseq
    %v260 = vshrl.u32 %v259, 7
    %v261 = vsub.s32 %v258, %v260
    %v262 = vrot.slane %v252, %v261
    %v263 = vcombine.high %v262, %v262
    %v265 = vunpack.c.l.s4 1966171168
    %v266 = vunpack.c.0.s8 %v265
    %v267 = vlaneseq
    %v268 = vshrl.u32 %v267, 7
    %v269 = vsub.s32 %v266, %v268
    %v270 = vrot.slane %v262, %v269
    %v272 = vunpack.c.l.s4 1966171168
    %v273 = vunpack.c.0.s8 %v272
    %v274 = vlaneseq
    %v275 = vshrl.u32 %v274, 7
    %v276 = vsub.s32 %v273, %v275
    %v277 = vrot.slane %v263, %v276
    %v278 = vlaneseq
    %v279 = vshrl.u32 %v278, 7
    %v280 = vsub.s32 0, %v279
    %v281 = vrot.slane %v270, %v280
    %v282 = vlaneseq
    %v283 = vshrl.u32 %v282, 7
    %v284 = vsub.s32 0, %v283
    %v285 = vrot.slane %v277, %v284
    %v288 = vadd.f32 %v162, %v281
    %v289 = vadd.f32 %v167, %v285
    %v290 = vtanh.pop %v288
    %v291 = vtanh.pop %v289
    %v292 = vld [vmem:[%s6] sm:$0x1]
    %v294 = vlaneseq
    %v295 = vshrl.u32 %v294, 7
    %v296 = vsub.s32 0, %v295
    %v297 = vrot.slane %v292, %v296
    %v299 = vmul.f32 %v290, %v297
    %v300 = vmul.f32 %v291, %v297
    %v301 = vsel %vm88, %v299, 0.0
    %302 = vadd.xlane.f32.xlu0 %v301
    %v303 = vpop.xlane.xlu0 %302
    %v304 = vsel %vm88, %v300, 0.0
    %305 = vadd.xlane.f32.xlu0 %v304
    %v306 = vpop.xlane.xlu0 %305
    %s307 = sld [smem:[#allocation2]]
    %v308 = vstv %s307
    %v309 = vadd.f32 %v303, %v308
    %v310 = vadd.f32 %v306, %v308
    %v313 = vlaneseq
    %v314 = vand.u32 %v313, 127
    %v315 = vlaneseq
    %v316 = vshrl.u32 %v315, 7
    %v317 = vsub.s32 %v314, %v316
    %v318 = vrot.slane %v309, %v317
    %v319 = vlaneseq
    %v320 = vshrl.u32 %v319, 7
    %v321 = vsub.s32 %v314, %v320
    %v322 = vrot.slane %v310, %v321
    %vm323 = vcmask 1041409
    %v324 = vsel %vm323, %v322, %v318
    %vm326 = vcmask 58368
    %v327 = vsel %vm326, %v324, -inf
    %328 = vmax.xlane.f32.xlu0 %v327
    %v329 = vpop.xlane.xlu0 %328
    %v331 = vlaneseq
    %v332 = vshrl.u32 %v331, 7
    %v333 = vsub.s32 0, %v332
    %v334 = vrot.slane %v329, %v333
    %v335 = vlaneseq
    %v336 = vshrl.u32 %v335, 7
    %v337 = vsub.s32 1, %v336
    %v338 = vrot.slane %v329, %v337
    %v341 = vsub.f32 %v309, %v334
    %v342 = vsub.f32 %v310, %v338
    %v343 = vmul.f32 %v341, 1.442695
    %v344 = vpow.pop %v343
    %v345 = vmul.f32 %v342, 1.442695
    %v346 = vpow.pop %v345
    %349 = vset.pattern.permute.xlu0 0
    %350 = vperm.xlu0 %349, %v344
    %v351 = vpop.permute.xlu0 %350
    %352 = vset.pattern.permute.xlu0 0
    %353 = vperm.xlu0 %352, %v346
    %v354 = vpop.permute.xlu0 %353
    %v355 = vlaneseq
    %v356 = vshrl.u32 %v355, 7
    %v357 = vsub.s32 %v314, %v356
    %v358 = vrot.slane %v351, %v357
    %v359 = vlaneseq
    %v360 = vshrl.u32 %v359, 7
    %v361 = vsub.s32 %v314, %v360
    %v362 = vrot.slane %v354, %v361
    %v363 = vsel %vm323, %v362, %v358
    %v365 = vsel %vm326, %v363, 0.0
    %366 = vadd.xlane.f32.xlu0 %v365
    %v367 = vpop.xlane.xlu0 %366
    %v368 = vrcp.pop %v367
    %v370 = vlaneseq
    %v371 = vshrl.u32 %v370, 7
    %v372 = vsub.s32 0, %v371
    %v373 = vrot.slane %v368, %v372
    %v374 = vlaneseq
    %v375 = vshrl.u32 %v374, 7
    %v376 = vsub.s32 1, %v375
    %v377 = vrot.slane %v368, %v376
    %v380 = vmul.f32 %v344, %v373
    %v381 = vmul.f32 %v346, %v377
    %384 = vset.pattern.permute.xlu0 0
    %385 = vperm.xlu0 %384, %v380
    %v386 = vpop.permute.xlu0 %385
    %387 = vset.pattern.permute.xlu0 0
    %388 = vperm.xlu0 %387, %v381
    %v389 = vpop.permute.xlu0 %388
    %v390 = vlaneseq
    %v391 = vshrl.u32 %v390, 7
    %v392 = vsub.s32 %v314, %v391
    %v393 = vrot.slane %v386, %v392
    %v394 = vlaneseq
    %v395 = vshrl.u32 %v394, 7
    %v396 = vsub.s32 %v314, %v395
    %v397 = vrot.slane %v389, %v396
    %v398 = vsel %vm323, %v397, %v393
    %400 = vst.msk [vmem:[#allocation10] sm:$0x3] %vm326, %v398
    %v403 = vmul.f32 %v386, %v75
    %v404 = vmul.f32 %v389, %v76
    %v405 = vsel %vm88, %v403, 0.0
    %v406 = vrot.slane %v405, 4
    %v407 = vadd.f32 %v405, %v406
    %v408 = vrot.slane %v407, 2
    %v409 = vadd.f32 %v407, %v408
    %v410 = vrot.slane %v409, 1
    %v411 = vadd.f32 %v409, %v410
    %v412 = vsel %vm88, %v404, 0.0
    %v413 = vrot.slane %v412, 4
    %v414 = vadd.f32 %v412, %v413
    %v415 = vrot.slane %v414, 2
    %v416 = vadd.f32 %v414, %v415
    %v417 = vrot.slane %v416, 1
    %v418 = vadd.f32 %v416, %v417
    %v421 = vsel %vm323, %v418, %v411
    %vm423 = vcmask 254976
    %424 = vst.msk [vmem:[#allocation9] sm:$0x3] %vm423, %v421
    // Predicated region
    $region46: #{tpu_custom_call.1} parent=1 // pred_check
      _
    $region47: #{tpu_custom_call.1} parent=1 // pred_check_branch
      %426 = sbr.rel (0) target = $region49
    $region48: #{tpu_custom_call.1} parent=1 // pred_region
      %s428 = ssub.s32 32, 32
      %429 = vsyncadd [#allocation5], %s428
      %s431 = sshll.u32 [#allocation9], 4
      %s432 = int_to_ptr.vmem [resolvable:$true] %s431
      %434 = dma.vmem_to_hbm [thread:$0]  %s432, 32, %s8, [#allocation5]
    $region49: #{tpu_custom_call.1} parent=1 // pred_fallthru
      _
    // Predicated region
    $region50: #{tpu_custom_call.1} parent=1 // pred_check
      _
    $region51: #{tpu_custom_call.1} parent=1 // pred_check_branch
      %436 = sbr.rel (0) target = $region53
    $region52: #{tpu_custom_call.1} parent=1 // pred_region
      %s438 = ssub.s32 32, 32
      %439 = vsyncadd [#allocation11], %s438
      %s441 = sshll.u32 [#allocation10], 4
      %s442 = int_to_ptr.vmem [resolvable:$true] %s441
      %444 = dma.vmem_to_hbm [thread:$0]  %s442, 32, %s9, [#allocation11]
    $region53: #{tpu_custom_call.1} parent=1 // pred_fallthru
      _
    // Predicated region
    $region54: #{tpu_custom_call.1} parent=1 // pred_check
      _
    $region55: #{tpu_custom_call.1} parent=1 // pred_check_branch
      %446 = sbr.rel (0) target = $region57
    $region56: #{tpu_custom_call.1} parent=1 // pred_region
      %447 = dma.done [#allocation5], 32
    $region57: #{tpu_custom_call.1} parent=1 // pred_fallthru
      _
    // Predicated region
    $region58: #{tpu_custom_call.1} parent=1 // pred_check
      _
    $region59: #{tpu_custom_call.1} parent=1 // pred_check_branch
      %449 = sbr.rel (0) target = $region61
    $region60: #{tpu_custom_call.1} parent=1 // pred_region
      %450 = dma.done [#allocation11], 32
    $region61: #{tpu_custom_call.1} parent=1 // pred_fallthru
      _
    %451 = vsyncpa [#allocation4], 1
    %452 = vsyncpa [#allocation7], 1
    %453 = vsyncpa [#allocation5], 1
    %454 = vsyncpa [#allocation11], 1

</llo_original>
